<compile_context>
chip_gen: v7x
topology: tpu7x:2x2x1
jax: 0.10.0
libtpu: 0.0.40
codegen_flags: <defaults>
</compile_context>

<pallas_src>
import functools

import jax
import jax.numpy as jnp
from jax import lax
from jax.experimental import pallas as pl
from jax.experimental.pallas import tpu as pltpu


def _unet_block_kernel(x_ref, b1_ref, b2_ref, sh_ref, o_ref,
                       xpad_ref, ypad_ref, *, H):
    """One batch element per grid step; both conv stages fused.

    x_ref:    (1, H, W*Cin)                input slab (VMEM)
    b1_ref:   (3, W*Cin,  W*Cout)          conv1 banded weights (BN scale folded in)
    b2_ref:   (3, W*Cout, W*Cout)          conv2 banded weights (BN scale folded in)
    sh_ref:   (2, W*Cout)                  rows = [shift1, shift2] (bias+BN folded)
    o_ref:    (1, H, W*Cout)               output slab
    xpad_ref: (H+2, W*Cin)                 VMEM scratch, H-halo-padded input
    ypad_ref: (H+2, W*Cout)                VMEM scratch, H-halo-padded intermediate
    """
    WCin = xpad_ref.shape[1]
    WCout = ypad_ref.shape[1]

    def banded_conv(pad_ref, b_ref):
        # 3x3 conv == sum over the 3 kernel rows of one lane-dense MXU matmul each;
        # the W-direction taps + "SAME" zero padding live inside b_ref.
        acc = jnp.dot(pad_ref[0:H, :], b_ref[0],
                      preferred_element_type=jnp.float32)
        for dh in (1, 2):
            acc = acc + jnp.dot(pad_ref[dh:dh + H, :], b_ref[dh],
                                preferred_element_type=jnp.float32)
        return acc

    # --- build H-halo-padded input in VMEM (border rows only; no full zero-fill) ---
    xpad_ref[0:1, :] = jnp.zeros((1, WCin), jnp.float32)
    xpad_ref[H + 1:H + 2, :] = jnp.zeros((1, WCin), jnp.float32)
    xpad_ref[1:H + 1, :] = x_ref[0]

    # --- conv1 + folded(bias+BN) + ReLU; intermediate stays in VMEM ---
    y = jnp.maximum(banded_conv(xpad_ref, b1_ref) + sh_ref[0][None, :], 0.0)
    # Dropout(0.3): identity in eval mode.

    ypad_ref[0:1, :] = jnp.zeros((1, WCout), jnp.float32)
    ypad_ref[H + 1:H + 2, :] = jnp.zeros((1, WCout), jnp.float32)
    ypad_ref[1:H + 1, :] = y

    # --- conv2 + folded(bias+BN) + ReLU -> lane-dense output store ---
    z = jnp.maximum(banded_conv(ypad_ref, b2_ref) + sh_ref[1][None, :], 0.0)
    o_ref[0] = z.astype(o_ref.dtype)


def _build_banded(w_hwio, scale, W):
    """Fold the 3x3 conv (W-direction taps + SAME padding + BN scale) into
    3 block-banded matrices, one per kernel row dh.

    w_hwio: (3, 3, Cin, Cout); scale: (Cout,)  ->  (3, W*Cin, W*Cout)
    B[dh, w_in*Cin + ci, w_out*Cout + co] = scale[co] * w[dh, w_in - w_out + 1, ci, co]
    when 0 <= w_in - w_out + 1 <= 2, else 0.
    """
    KH, KW, Cin, Cout = w_hwio.shape
    w = w_hwio * scale[None, None, None, :]
    w_in = jnp.arange(W)[None, :, None]                     # (1, W, 1)
    w_out = jnp.arange(W)[None, None, :]                    # (1, 1, W)
    dw = jnp.arange(KW)[:, None, None]                      # (KW, 1, 1)
    sel = (w_in == (w_out + dw - 1)).astype(w.dtype)        # (KW, W, W)
    band = jnp.einsum("dab,hdio->haibo", sel, w)            # (KH, W, Cin, W, Cout)
    return band.reshape(KH, W * Cin, W * Cout)


def unet_block_forward(x_nchw, params, eps=1e-5):
    """UNetBlock forward. x_nchw: (N, Cin, H, W) float32 -> (N, Cout, H, W)."""
    N, Cin, H, W = x_nchw.shape
    Cout = params["w1"].shape[-1]

    # Fold conv bias + BatchNorm into one affine per conv at trace time;
    # the scale goes into the banded conv weights, the shift stays as an epilogue add.
    s1 = params["g1"] / jnp.sqrt(params["v1"] + eps)
    t1 = params["be1"] + (params["b1"] - params["m1"]) * s1
    s2 = params["g2"] / jnp.sqrt(params["v2"] + eps)
    t2 = params["be2"] + (params["b2"] - params["m2"]) * s2

    b1 = _build_banded(params["w1"], s1, W).astype(jnp.float32)   # (3, W*Cin,  W*Cout)
    b2 = _build_banded(params["w2"], s2, W).astype(jnp.float32)   # (3, W*Cout, W*Cout)
    shifts = jnp.stack([jnp.tile(t1, W), jnp.tile(t2, W)], axis=0).astype(jnp.float32)

    # NCHW -> (N, H, W*Cin) slab (channels fused onto the lane axis).
    x = jnp.transpose(x_nchw, (0, 2, 3, 1)).reshape(N, H, W * Cin)

    kernel = functools.partial(_unet_block_kernel, H=H)

    out = pl.pallas_call(
        kernel,
        out_shape=jax.ShapeDtypeStruct((N, H, W * Cout), jnp.float32),
        grid_spec=pltpu.PrefetchScalarGridSpec(
            num_scalar_prefetch=0,
            grid=(N,),
            in_specs=[
                pl.BlockSpec((1, H, W * Cin), lambda n: (n, 0, 0)),
                pl.BlockSpec((3, W * Cin, W * Cout), lambda n: (0, 0, 0)),
                pl.BlockSpec((3, W * Cout, W * Cout), lambda n: (0, 0, 0)),
                pl.BlockSpec((2, W * Cout), lambda n: (0, 0)),
            ],
            out_specs=pl.BlockSpec((1, H, W * Cout), lambda n: (n, 0, 0)),
            scratch_shapes=[
                pltpu.VMEM((H + 2, W * Cin), jnp.float32),
                pltpu.VMEM((H + 2, W * Cout), jnp.float32),
            ],
        ),
        compiler_params=pltpu.CompilerParams(
            dimension_semantics=("parallel",),
        ),
    )(x, b1, b2, shifts)

    out = out.reshape(N, H, W, Cout)
    return jnp.transpose(out, (0, 3, 1, 2))  # -> NCHW


def ref_forward(x_nchw, params, eps=1e-5):
    """Plain-JAX reference (NCHW) for correctness check."""
    def conv(x, w_hwio, b):
        w_oihw = jnp.transpose(w_hwio, (3, 2, 0, 1))  # HWIO -> OIHW
        y = lax.conv_general_dilated(
            x, w_oihw, window_strides=(1, 1), padding="SAME",
            dimension_numbers=("NCHW", "OIHW", "NCHW"),
        )
        return y + b[None, :, None, None]

    def bn(x, g, be, m, v):
        return (x - m[None, :, None, None]) / jnp.sqrt(v[None, :, None, None] + eps) \
            * g[None, :, None, None] + be[None, :, None, None]

    x = jnp.maximum(bn(conv(x_nchw, params["w1"], params["b1"]),
                       params["g1"], params["be1"], params["m1"], params["v1"]), 0.0)
    x = jnp.maximum(bn(conv(x, params["w2"], params["b2"]),
                       params["g2"], params["be2"], params["m2"], params["v2"]), 0.0)
    return x


def make_params(key, in_channels, out_channels):
    ks = jax.random.split(key, 12)
    fan1 = in_channels * 9
    fan2 = out_channels * 9
    return {
        # conv weights stored as HWIO: (3, 3, Cin, Cout)
        "w1": jax.random.normal(ks[0], (3, 3, in_channels, out_channels), jnp.float32) / jnp.sqrt(fan1),
        "b1": jax.random.normal(ks[1], (out_channels,), jnp.float32) * 0.1,
        "g1": 1.0 + 0.1 * jax.random.normal(ks[2], (out_channels,), jnp.float32),
        "be1": 0.1 * jax.random.normal(ks[3], (out_channels,), jnp.float32),
        "m1": 0.1 * jax.random.normal(ks[4], (out_channels,), jnp.float32),
        "v1": 1.0 + 0.1 * jnp.abs(jax.random.normal(ks[5], (out_channels,), jnp.float32)),
        "w2": jax.random.normal(ks[6], (3, 3, out_channels, out_channels), jnp.float32) / jnp.sqrt(fan2),
        "b2": jax.random.normal(ks[7], (out_channels,), jnp.float32) * 0.1,
        "g2": 1.0 + 0.1 * jax.random.normal(ks[8], (out_channels,), jnp.float32),
        "be2": 0.1 * jax.random.normal(ks[9], (out_channels,), jnp.float32),
        "m2": 0.1 * jax.random.normal(ks[10], (out_channels,), jnp.float32),
        "v2": 1.0 + 0.1 * jnp.abs(jax.random.normal(ks[11], (out_channels,), jnp.float32)),
    }


if __name__ == "__main__":
    N, Cin, Cout, H, W = 2, 4, 8, 16, 16

    key = jax.random.PRNGKey(0)
    kx, kp = jax.random.split(key)
    x = jax.random.normal(kx, (N, Cin, H, W), jnp.float32)   # NCHW, like PyTorch
    params = make_params(kp, Cin, Cout)

    out = jax.block_until_ready(unet_block_forward(x, params))
    ref = jax.block_until_ready(ref_forward(x, params))

    assert out.shape == (N, Cout, H, W), out.shape
    assert jnp.allclose(out, ref, rtol=1e-4, atol=1e-4), \
        f"max abs err {jnp.max(jnp.abs(out - ref))}"

    print("KERNEL_OK")
</pallas_src>

<mosaic_0001>
module attributes {stable_mosaic.version = 11 : i64} {
  func.func @_unet_block_kernel(%arg0: i32, %arg1: memref<1x16x64xf32, #tpu.memory_space<vmem>>, %arg2: memref<3x64x128xf32, #tpu.memory_space<vmem>>, %arg3: memref<3x128x128xf32, #tpu.memory_space<vmem>>, %arg4: memref<2x128xf32, #tpu.memory_space<vmem>>, %arg5: memref<1x16x128xf32, #tpu.memory_space<vmem>>, %arg6: memref<18x64xf32, #tpu.memory_space<vmem>>, %arg7: memref<18x128xf32, #tpu.memory_space<vmem>>) attributes {dimension_semantics = [#tpu.dimension_semantics<parallel>], iteration_bounds = array<i64: 2>, scalar_prefetch = 0 : i64, scratch_operands = 2 : i64, tpu.core_type = #tpu.core_type<tc>, window_params = [{transform_indices = @transform_0, window_bounds = array<i64: 1, 16, 64>}, {pipeline_mode = #tpu.pipeline_mode<synchronous>, transform_indices = @transform_1, window_bounds = array<i64: 3, 64, 128>}, {pipeline_mode = #tpu.pipeline_mode<synchronous>, transform_indices = @transform_2, window_bounds = array<i64: 3, 128, 128>}, {pipeline_mode = #tpu.pipeline_mode<synchronous>, transform_indices = @transform_3, window_bounds = array<i64: 2, 128>}, {transform_indices = @transform_4, window_bounds = array<i64: 1, 16, 128>}]} {
    %cst = arith.constant 0.000000e+00 : f32
    %0 = vector.broadcast %cst : f32 to vector<1x64xf32>
    %c0 = arith.constant 0 : index
    %c0_0 = arith.constant 0 : index
    %1 = vector.load %arg6[%c0, %c0_0] : memref<18x64xf32, #tpu.memory_space<vmem>>, vector<1x64xf32>
    tpu.vector_store %arg6[%c0, %c0_0], %0 {strides = array<i32>} : memref<18x64xf32, #tpu.memory_space<vmem>>, vector<1x64xf32>,
    %cst_1 = arith.constant 0.000000e+00 : f32
    %2 = vector.broadcast %cst_1 : f32 to vector<1x64xf32>
    %c17 = arith.constant 17 : index
    %c0_2 = arith.constant 0 : index
    %3 = vector.load %arg6[%c17, %c0_2] : memref<18x64xf32, #tpu.memory_space<vmem>>, vector<1x64xf32>
    tpu.vector_store %arg6[%c17, %c0_2], %2 {strides = array<i32>} : memref<18x64xf32, #tpu.memory_space<vmem>>, vector<1x64xf32>,
    %c0_3 = arith.constant 0 : index
    %c0_4 = arith.constant 0 : index
    %c0_5 = arith.constant 0 : index
    %4 = vector.load %arg1[%c0_3, %c0_4, %c0_5] : memref<1x16x64xf32, #tpu.memory_space<vmem>>, vector<1x16x64xf32>
    %5 = vector.shape_cast %4 : vector<1x16x64xf32> to vector<16x64xf32>
    %c1 = arith.constant 1 : index
    %c0_6 = arith.constant 0 : index
    %6 = vector.load %arg6[%c1, %c0_6] : memref<18x64xf32, #tpu.memory_space<vmem>>, vector<16x64xf32>
    tpu.vector_store %arg6[%c1, %c0_6], %5 {strides = array<i32>} : memref<18x64xf32, #tpu.memory_space<vmem>>, vector<16x64xf32>,
    %c0_7 = arith.constant 0 : index
    %c0_8 = arith.constant 0 : index
    %7 = vector.load %arg6[%c0_7, %c0_8] : memref<18x64xf32, #tpu.memory_space<vmem>>, vector<16x64xf32>
    %c0_9 = arith.constant 0 : index
    %c0_10 = arith.constant 0 : index
    %c0_11 = arith.constant 0 : index
    %8 = vector.load %arg2[%c0_9, %c0_10, %c0_11] : memref<3x64x128xf32, #tpu.memory_space<vmem>>, vector<1x64x128xf32>
    %9 = vector.shape_cast %8 : vector<1x64x128xf32> to vector<64x128xf32>
    %cst_12 = arith.constant dense<0.000000e+00> : vector<16x128xf32>
    %10 = tpu.matmul %7, %9, %cst_12 {dimension_numbers = #tpu.dot_dimension_numbers<[1], [0], [0], [1], [0, 0, 1, 1], [], []>} : vector<16x64xf32>, vector<64x128xf32>, vector<16x128xf32> -> vector<16x128xf32>
    %c1_13 = arith.constant 1 : index
    %c0_14 = arith.constant 0 : index
    %11 = vector.load %arg6[%c1_13, %c0_14] : memref<18x64xf32, #tpu.memory_space<vmem>>, vector<16x64xf32>
    %c1_15 = arith.constant 1 : index
    %c0_16 = arith.constant 0 : index
    %c0_17 = arith.constant 0 : index
    %12 = vector.load %arg2[%c1_15, %c0_16, %c0_17] : memref<3x64x128xf32, #tpu.memory_space<vmem>>, vector<1x64x128xf32>
    %13 = vector.shape_cast %12 : vector<1x64x128xf32> to vector<64x128xf32>
    %cst_18 = arith.constant dense<0.000000e+00> : vector<16x128xf32>
    %14 = tpu.matmul %11, %13, %cst_18 {dimension_numbers = #tpu.dot_dimension_numbers<[1], [0], [0], [1], [0, 0, 1, 1], [], []>} : vector<16x64xf32>, vector<64x128xf32>, vector<16x128xf32> -> vector<16x128xf32>
    %15 = arith.addf %10, %14 : vector<16x128xf32>
    %c2 = arith.constant 2 : index
    %c0_19 = arith.constant 0 : index
    %16 = vector.load %arg6[%c2, %c0_19] : memref<18x64xf32, #tpu.memory_space<vmem>>, vector<16x64xf32>
    %c2_20 = arith.constant 2 : index
    %c0_21 = arith.constant 0 : index
    %c0_22 = arith.constant 0 : index
    %17 = vector.load %arg2[%c2_20, %c0_21, %c0_22] : memref<3x64x128xf32, #tpu.memory_space<vmem>>, vector<1x64x128xf32>
    %18 = vector.shape_cast %17 : vector<1x64x128xf32> to vector<64x128xf32>
    %cst_23 = arith.constant dense<0.000000e+00> : vector<16x128xf32>
    %19 = tpu.matmul %16, %18, %cst_23 {dimension_numbers = #tpu.dot_dimension_numbers<[1], [0], [0], [1], [0, 0, 1, 1], [], []>} : vector<16x64xf32>, vector<64x128xf32>, vector<16x128xf32> -> vector<16x128xf32>
    %20 = arith.addf %15, %19 : vector<16x128xf32>
    %c0_24 = arith.constant 0 : index
    %c0_25 = arith.constant 0 : index
    %21 = vector.load %arg4[%c0_24, %c0_25] : memref<2x128xf32, #tpu.memory_space<vmem>>, vector<1x128xf32>
    %22 = vector.shape_cast %21 : vector<1x128xf32> to vector<128xf32>
    %23 = vector.shape_cast %22 : vector<128xf32> to vector<1x128xf32>
    %24 = vector.broadcast %23 : vector<1x128xf32> to vector<16x128xf32>
    %25 = arith.addf %20, %24 : vector<16x128xf32>
    %cst_26 = arith.constant 0.000000e+00 : f32
    %26 = vector.broadcast %cst_26 : f32 to vector<16x128xf32>
    %27 = arith.maximumf %25, %26 : vector<16x128xf32>
    %cst_27 = arith.constant 0.000000e+00 : f32
    %28 = vector.broadcast %cst_27 : f32 to vector<1x128xf32>
    %c0_28 = arith.constant 0 : index
    %c0_29 = arith.constant 0 : index
    %29 = vector.load %arg7[%c0_28, %c0_29] : memref<18x128xf32, #tpu.memory_space<vmem>>, vector<1x128xf32>
    tpu.vector_store %arg7[%c0_28, %c0_29], %28 {strides = array<i32>} : memref<18x128xf32, #tpu.memory_space<vmem>>, vector<1x128xf32>,
    %cst_30 = arith.constant 0.000000e+00 : f32
    %30 = vector.broadcast %cst_30 : f32 to vector<1x128xf32>
    %c17_31 = arith.constant 17 : index
    %c0_32 = arith.constant 0 : index
    %31 = vector.load %arg7[%c17_31, %c0_32] : memref<18x128xf32, #tpu.memory_space<vmem>>, vector<1x128xf32>
    tpu.vector_store %arg7[%c17_31, %c0_32], %30 {strides = array<i32>} : memref<18x128xf32, #tpu.memory_space<vmem>>, vector<1x128xf32>,
    %c1_33 = arith.constant 1 : index
    %c0_34 = arith.constant 0 : index
    %32 = vector.load %arg7[%c1_33, %c0_34] : memref<18x128xf32, #tpu.memory_space<vmem>>, vector<16x128xf32>
    tpu.vector_store %arg7[%c1_33, %c0_34], %27 {strides = array<i32>} : memref<18x128xf32, #tpu.memory_space<vmem>>, vector<16x128xf32>,
    %c0_35 = arith.constant 0 : index
    %c0_36 = arith.constant 0 : index
    %33 = vector.load %arg7[%c0_35, %c0_36] : memref<18x128xf32, #tpu.memory_space<vmem>>, vector<16x128xf32>
    %c0_37 = arith.constant 0 : index
    %c0_38 = arith.constant 0 : index
    %c0_39 = arith.constant 0 : index
    %34 = vector.load %arg3[%c0_37, %c0_38, %c0_39] : memref<3x128x128xf32, #tpu.memory_space<vmem>>, vector<1x128x128xf32>
    %35 = vector.shape_cast %34 : vector<1x128x128xf32> to vector<128x128xf32>
    %cst_40 = arith.constant dense<0.000000e+00> : vector<16x128xf32>
    %36 = tpu.matmul %33, %35, %cst_40 {dimension_numbers = #tpu.dot_dimension_numbers<[1], [0], [0], [1], [0, 0, 1, 1], [], []>} : vector<16x128xf32>, vector<128x128xf32>, vector<16x128xf32> -> vector<16x128xf32>
    %c1_41 = arith.constant 1 : index
    %c0_42 = arith.constant 0 : index
    %37 = vector.load %arg7[%c1_41, %c0_42] : memref<18x128xf32, #tpu.memory_space<vmem>>, vector<16x128xf32>
    %c1_43 = arith.constant 1 : index
    %c0_44 = arith.constant 0 : index
    %c0_45 = arith.constant 0 : index
    %38 = vector.load %arg3[%c1_43, %c0_44, %c0_45] : memref<3x128x128xf32, #tpu.memory_space<vmem>>, vector<1x128x128xf32>
    %39 = vector.shape_cast %38 : vector<1x128x128xf32> to vector<128x128xf32>
    %cst_46 = arith.constant dense<0.000000e+00> : vector<16x128xf32>
    %40 = tpu.matmul %37, %39, %cst_46 {dimension_numbers = #tpu.dot_dimension_numbers<[1], [0], [0], [1], [0, 0, 1, 1], [], []>} : vector<16x128xf32>, vector<128x128xf32>, vector<16x128xf32> -> vector<16x128xf32>
    %41 = arith.addf %36, %40 : vector<16x128xf32>
    %c2_47 = arith.constant 2 : index
    %c0_48 = arith.constant 0 : index
    %42 = vector.load %arg7[%c2_47, %c0_48] : memref<18x128xf32, #tpu.memory_space<vmem>>, vector<16x128xf32>
    %c2_49 = arith.constant 2 : index
    %c0_50 = arith.constant 0 : index
    %c0_51 = arith.constant 0 : index
    %43 = vector.load %arg3[%c2_49, %c0_50, %c0_51] : memref<3x128x128xf32, #tpu.memory_space<vmem>>, vector<1x128x128xf32>
    %44 = vector.shape_cast %43 : vector<1x128x128xf32> to vector<128x128xf32>
    %cst_52 = arith.constant dense<0.000000e+00> : vector<16x128xf32>
    %45 = tpu.matmul %42, %44, %cst_52 {dimension_numbers = #tpu.dot_dimension_numbers<[1], [0], [0], [1], [0, 0, 1, 1], [], []>} : vector<16x128xf32>, vector<128x128xf32>, vector<16x128xf32> -> vector<16x128xf32>
    %46 = arith.addf %41, %45 : vector<16x128xf32>
    %c1_53 = arith.constant 1 : index
    %c0_54 = arith.constant 0 : index
    %47 = vector.load %arg4[%c1_53, %c0_54] : memref<2x128xf32, #tpu.memory_space<vmem>>, vector<1x128xf32>
    %48 = vector.shape_cast %47 : vector<1x128xf32> to vector<128xf32>
    %49 = vector.shape_cast %48 : vector<128xf32> to vector<1x128xf32>
    %50 = vector.broadcast %49 : vector<1x128xf32> to vector<16x128xf32>
    %51 = arith.addf %46, %50 : vector<16x128xf32>
    %cst_55 = arith.constant 0.000000e+00 : f32
    %52 = vector.broadcast %cst_55 : f32 to vector<16x128xf32>
    %53 = arith.maximumf %51, %52 : vector<16x128xf32>
    %c0_56 = arith.constant 0 : index
    %c0_57 = arith.constant 0 : index
    %c0_58 = arith.constant 0 : index
    %54 = vector.load %arg5[%c0_56, %c0_57, %c0_58] : memref<1x16x128xf32, #tpu.memory_space<vmem>>, vector<1x16x128xf32>
    %55 = vector.shape_cast %54 : vector<1x16x128xf32> to vector<16x128xf32>
    %56 = vector.shape_cast %53 : vector<16x128xf32> to vector<1x16x128xf32>
    tpu.vector_store %arg5[%c0_56, %c0_57, %c0_58], %56 {strides = array<i32>} : memref<1x16x128xf32, #tpu.memory_space<vmem>>, vector<1x16x128xf32>,
    return
  }
  func.func @transform_0(%arg0: i32) -> (i32, i32, i32) {
    %c0_i32 = arith.constant 0 : i32
    %c0_i32_0 = arith.constant 0 : i32
    %c0_i32_1 = arith.constant 0 : i32
    return %arg0, %c0_i32, %c0_i32_0 : i32, i32, i32
  }
  func.func @transform_1(%arg0: i32) -> (i32, i32, i32) {
    %c0_i32 = arith.constant 0 : i32
    %c0_i32_0 = arith.constant 0 : i32
    %c0_i32_1 = arith.constant 0 : i32
    %c0_i32_2 = arith.constant 0 : i32
    return %c0_i32, %c0_i32_0, %c0_i32_1 : i32, i32, i32
  }
  func.func @transform_2(%arg0: i32) -> (i32, i32, i32) {
    %c0_i32 = arith.constant 0 : i32
    %c0_i32_0 = arith.constant 0 : i32
    %c0_i32_1 = arith.constant 0 : i32
    %c0_i32_2 = arith.constant 0 : i32
    return %c0_i32, %c0_i32_0, %c0_i32_1 : i32, i32, i32
  }
  func.func @transform_3(%arg0: i32) -> (i32, i32) {
    %c0_i32 = arith.constant 0 : i32
    %c0_i32_0 = arith.constant 0 : i32
    %c0_i32_1 = arith.constant 0 : i32
    return %c0_i32, %c0_i32_0 : i32, i32
  }
  func.func @transform_4(%arg0: i32) -> (i32, i32, i32) {
    %c0_i32 = arith.constant 0 : i32
    %c0_i32_0 = arith.constant 0 : i32
    %c0_i32_1 = arith.constant 0 : i32
    return %arg0, %c0_i32, %c0_i32_0 : i32, i32, i32
  }
}

</mosaic_0001>

<llo_original>
// kernel: tpu_custom_call.1
$region0: #{tpu_custom_call.1}
  #allocation0 [shape = 'u32[]', space=smem, size = 0x4, offset = 0x4, fixed_abs, tag = 'smem constant byte address 0x4 - core index']
  #allocation1 [shape = 'u32[144,128]{1,0:T(1,128)}', space=vmem, size = 0x12000, scoped, tag = 'internal scratch']
  #allocation2 [shape = 'f32[18,64]{1,0:T(8,128)}', space=vmem, size = 0x3000, scoped, tag = 'scratch operand']
  #allocation3 [shape = 'f32[18,128]{1,0:T(8,128)}', space=vmem, size = 0x3000, scoped, tag = 'scratch operand']
  %s0 = inlined_call_operand.hbm [shape: f32[2,16,64], index: 0, kind: input, shape index: {}]
  %s1 = inlined_call_operand.hbm [shape: f32[3,64,128], index: 1, kind: input, shape index: {}]
  %s2 = inlined_call_operand.hbm [shape: f32[3,128,128], index: 2, kind: input, shape index: {}]
  %s3 = inlined_call_operand.vmem [shape: f32[2,128], index: 3, kind: input, shape index: {}]
  %s4 = inlined_call_operand.hbm [shape: f32[2,16,128], index: 4, kind: output, shape index: {}]
  %s5 = sld [smem:[#allocation0]]
  $region61: #{tpu_custom_call.1} parent=0
    _
  %s7 = ssub.s32 1, %s5
  %s8 = scalar_select 0, %s7, %s5
  $region1: #{tpu_custom_call.1} parent=0
    #allocation4 [shape = 'u8[16384]{0}', space=vmem, size = 0x4000, scoped, tag = 'input window, operand 0']
    #allocation5 [shape = 's32[2]{0}', space=sflag, size = 0x8, scoped, tag = 'scoped memory for tpu_custom_call.1']
    #allocation6 [shape = 's32[2]{0}', space=sflag, size = 0x8, scoped, tag = 'scoped memory for tpu_custom_call.1']
    #allocation7 [shape = 'u8[98304]{0}', space=vmem, size = 0x18000, scoped, tag = 'input window, operand 1, single buffered']
    #allocation8 [shape = 's32[1]{0}', space=sflag, size = 0x4, scoped, tag = 'scoped memory for tpu_custom_call.1']
    #allocation9 [shape = 'u8[196608]{0}', space=vmem, size = 0x30000, scoped, tag = 'input window, operand 2, single buffered']
    #allocation10 [shape = 'u8[16384]{0}', space=vmem, size = 0x4000, scoped, tag = 'output window, operand 0']
    %9 = vsyncpa [#allocation5], 0
    %s10 = scalar_lea.sflag [#allocation5], 1
    %11 = vsyncpa %s10, 0
    %12 = vsyncpa [#allocation8], 0
    %13 = vsyncpa [#allocation6], 0
    %s14 = scalar_lea.sflag [#allocation6], 1
    %15 = vsyncpa %s14, 0
    loop: start=0, step=1, limit=4
    $region2: #{tpu_custom_call.1} parent=1 // loop_pre_header
      _
    $region3: #{tpu_custom_call.1} parent=1 // loop_header
      %s17 = sphi 0, %s21
      %p18 = scmp.ge.s32.totalorder %s17, 4
      %s27 = sphi 0, %s29
      %s30 = sphi 0, %s27
      %s31 = sphi 0, %s30
      %s47 = sphi 0, %s31
      %s51 = sphi 0, %s51
      %s53 = sphi 0, %s51
      %s54 = sphi 0, %s53
      %s68 = sphi 0, %s54
      %s72 = sphi 0, %s72
      %s74 = sphi 0, %s72
      %s75 = sphi 0, %s74
      %s89 = sphi 0, %s75
      %s93 = sphi 0, %s93
      %s95 = sphi 0, %s93
      %s96 = sphi 0, %s95
      %s110 = sphi 0, %s96
      %s116 = sphi 0, %s118
      %s119 = sphi 0, %s116
      %s120 = sphi 0, %s119
      %s136 = sphi 0, %s120
    $region4: #{tpu_custom_call.1} parent=1 // loop_header_branch
      %20 = sbr.rel (%p18) target = $region8
    $region5: #{tpu_custom_call.1} parent=1 // loop_body
      %s22 = ssub.s32 %s17, 1
      %s23 = ssub.s32 %s17, 2
      %s24 = sadd.s32 %s17, 1
      %s25 = ssub.s32 %s17, %s24
      %p26 = scmp.eq.s32.totalorder %s25, 0
      %s28 = sadd.s32 %s27, 1
      %s29 = scalar_select %p26, %s27, %s28
      %p32 = pneg %p26
      %p33 = scmp.eq.s32.totalorder %s17, 1
      %p34 = por %p32, %p33
      %p35 = scmp.ne.s32.totalorder %s27, %s30
      %p36 = scmp.eq.s32.totalorder %s17, 0
      %p37 = por %p35, %p36
      %p38 = scmp.ne.s32.totalorder %s27, %s30
      %p39 = scmp.eq.s32.totalorder %s22, 1
      %p40 = por %p38, %p39
      %p41 = scmp.ne.s32.totalorder %s30, %s31
      %p42 = scmp.eq.s32.totalorder %s22, 0
      %p43 = por %p41, %p42
      %p44 = scmp.ne.s32.totalorder %s30, %s31
      %p45 = scmp.eq.s32.totalorder %s23, 1
      %p46 = por %p44, %p45
      %p48 = scmp.ne.s32.totalorder %s31, %s47
      %p49 = scmp.eq.s32.totalorder %s23, 0
      %p50 = por %p48, %p49
      %s52 = sadd.s32 %s51, 1
      %p55 = scmp.eq.s32.totalorder %s17, 1
      %p56 = scmp.ne.s32.totalorder %s51, %s53
      %p57 = scmp.eq.s32.totalorder %s17, 0
      %p58 = por %p56, %p57
      %p59 = scmp.ne.s32.totalorder %s51, %s53
      %p60 = scmp.eq.s32.totalorder %s22, 1
      %p61 = por %p59, %p60
      %p62 = scmp.ne.s32.totalorder %s53, %s54
      %p63 = scmp.eq.s32.totalorder %s22, 0
      %p64 = por %p62, %p63
      %p65 = scmp.ne.s32.totalorder %s53, %s54
      %p66 = scmp.eq.s32.totalorder %s23, 1
      %p67 = por %p65, %p66
      %p69 = scmp.ne.s32.totalorder %s54, %s68
      %p70 = scmp.eq.s32.totalorder %s23, 0
      %p71 = por %p69, %p70
      %s73 = sadd.s32 %s72, 1
      %p76 = scmp.eq.s32.totalorder %s17, 1
      %p77 = scmp.ne.s32.totalorder %s72, %s74
      %p78 = scmp.eq.s32.totalorder %s17, 0
      %p79 = por %p77, %p78
      %p80 = scmp.ne.s32.totalorder %s72, %s74
      %p81 = scmp.eq.s32.totalorder %s22, 1
      %p82 = por %p80, %p81
      %p83 = scmp.ne.s32.totalorder %s74, %s75
      %p84 = scmp.eq.s32.totalorder %s22, 0
      %p85 = por %p83, %p84
      %p86 = scmp.ne.s32.totalorder %s74, %s75
      %p87 = scmp.eq.s32.totalorder %s23, 1
      %p88 = por %p86, %p87
      %p90 = scmp.ne.s32.totalorder %s75, %s89
      %p91 = scmp.eq.s32.totalorder %s23, 0
      %p92 = por %p90, %p91
      %s94 = sadd.s32 %s93, 1
      %p97 = scmp.eq.s32.totalorder %s17, 1
      %p98 = scmp.ne.s32.totalorder %s93, %s95
      %p99 = scmp.eq.s32.totalorder %s17, 0
      %p100 = por %p98, %p99
      %p101 = scmp.ne.s32.totalorder %s93, %s95
      %p102 = scmp.eq.s32.totalorder %s22, 1
      %p103 = por %p101, %p102
      %p104 = scmp.ne.s32.totalorder %s95, %s96
      %p105 = scmp.eq.s32.totalorder %s22, 0
      %p106 = por %p104, %p105
      %p107 = scmp.ne.s32.totalorder %s95, %s96
      %p108 = scmp.eq.s32.totalorder %s23, 1
      %p109 = por %p107, %p108
      %p111 = scmp.ne.s32.totalorder %s96, %s110
      %p112 = scmp.eq.s32.totalorder %s23, 0
      %p113 = por %p111, %p112
      %s114 = ssub.s32 %s17, %s24
      %p115 = scmp.eq.s32.totalorder %s114, 0
      %s117 = sadd.s32 %s116, 1
      %s118 = scalar_select %p115, %s116, %s117
      %p121 = pneg %p115
      %p122 = scmp.eq.s32.totalorder %s17, 1
      %p123 = por %p121, %p122
      %p124 = scmp.ne.s32.totalorder %s116, %s119
      %p125 = scmp.eq.s32.totalorder %s17, 0
      %p126 = por %p124, %p125
      %p127 = scmp.ne.s32.totalorder %s116, %s119
      %p128 = scmp.eq.s32.totalorder %s22, 1
      %p129 = por %p127, %p128
      %p130 = scmp.ne.s32.totalorder %s119, %s120
      %p131 = scmp.eq.s32.totalorder %s22, 0
      %p132 = por %p130, %p131
      %p133 = scmp.ne.s32.totalorder %s119, %s120
      %p134 = scmp.eq.s32.totalorder %s23, 1
      %p135 = por %p133, %p134
      %p137 = scmp.ne.s32.totalorder %s120, %s136
      %p138 = scmp.eq.s32.totalorder %s23, 0
      %p139 = por %p137, %p138
      %p140 = scmp.le.s32.totalorder 1, %s17
      %p141 = scmp.lt.s32.totalorder %s17, 3
      %p142 = pnand %p140, %p141
      %p143 = pneg %p142
      // Predicated region
      $region9: #{tpu_custom_call.1} parent=5 // pred_check
        _
      $region10: #{tpu_custom_call.1} parent=5 // pred_check_branch
        %145 = sbr.rel (%p142) target = $region12
      $region11: #{tpu_custom_call.1} parent=5 // pred_region
        %s146 = ssub.s32 %s17, 1
        // Predicated region
        $region13: #{tpu_custom_call.1} parent=11 // pred_check
          %p147 = pneg %p64
        $region14: #{tpu_custom_call.1} parent=11 // pred_check_branch
          %149 = sbr.rel (%p147) target = $region16
        $region15: #{tpu_custom_call.1} parent=11 // pred_region
          %s151 = ssub.s32 3072, 3072
          %152 = vsyncadd [#allocation8], %s151
          %s153 = sshll.u32 [#allocation7], 4
          %s154 = int_to_ptr.vmem [resolvable:$true] %s153
          %159 = dma.hbm_to_vmem [thread:$0]  %s1, 3072, %s154, [#allocation8], 128, 128, 8
        $region16: #{tpu_custom_call.1} parent=11 // pred_fallthru
          _
        // Predicated region
        $region17: #{tpu_custom_call.1} parent=11 // pred_check
          %p160 = pneg %p85
        $region18: #{tpu_custom_call.1} parent=11 // pred_check_branch
          %162 = sbr.rel (%p160) target = $region20
        $region19: #{tpu_custom_call.1} parent=11 // pred_region
          %s164 = ssub.s32 6144, 6144
          %165 = vsyncadd [#allocation8], %s164
          %s166 = sshll.u32 [#allocation9], 4
          %s167 = int_to_ptr.vmem [resolvable:$true] %s166
          %172 = dma.hbm_to_vmem [thread:$0]  %s2, 6144, %s167, [#allocation8], 128, 128, 8
        $region20: #{tpu_custom_call.1} parent=11 // pred_fallthru
          _
        // Predicated region
        $region21: #{tpu_custom_call.1} parent=11 // pred_check
          %p173 = pneg %p106
        $region22: #{tpu_custom_call.1} parent=11 // pred_check_branch
          %175 = sbr.rel (%p173) target = $region24
        $region23: #{tpu_custom_call.1} parent=11 // pred_region
          _
        $region24: #{tpu_custom_call.1} parent=11 // pred_fallthru
          _
      $region12: #{tpu_custom_call.1} parent=5 // pred_fallthru
        _
      %p176 = scmp.lt.s32.totalorder %s17, 2
      // Predicated region
      $region25: #{tpu_custom_call.1} parent=5 // pred_check
        %p177 = pneg %p176
      $region26: #{tpu_custom_call.1} parent=5 // pred_check_branch
        %179 = sbr.rel (%p177) target = $region28
      $region27: #{tpu_custom_call.1} parent=5 // pred_region
        // Predicated region
        $region29: #{tpu_custom_call.1} parent=27 // pred_check
          %p180 = pneg %p37
        $region30: #{tpu_custom_call.1} parent=27 // pred_check_branch
          %182 = sbr.rel (%p180) target = $region32
        $region31: #{tpu_custom_call.1} parent=27 // pred_region
          %s183 = sand.u32 %s27, 1
          %s184 = scalar_lea.sflag [#allocation5], %s183
          %s185 = sand.u32 %s27, 1
          %s186 = smul.addr %s185, 16
          %s187 = scalar_lea.vmem [#allocation4], %s186
          %s189 = ssub.s32 256, 256
          %190 = vsyncadd %s184, %s189
          %s191 = smul.addr %s17, 2
          %s192 = smul.addr %s191, 128
          %s193 = scalar_lea.hbm %s0, %s192
          %s194 = sshll.u32 %s187, 4
          %s195 = int_to_ptr.vmem [resolvable:$true] %s194
          %200 = dma.hbm_to_vmem [thread:$0]  %s193, 256, %s195, %s184, 128, 128, 8
        $region32: #{tpu_custom_call.1} parent=27 // pred_fallthru
          _
      $region28: #{tpu_custom_call.1} parent=5 // pred_fallthru
        _
      %p201 = scmp.le.s32.totalorder 1, %s17
      %p202 = scmp.lt.s32.totalorder %s17, 3
      %p203 = pnand %p201, %p202
      %p204 = pneg %p203
      // Predicated region
      $region33: #{tpu_custom_call.1} parent=5 // pred_check
        _
      $region34: #{tpu_custom_call.1} parent=5 // pred_check_branch
        %206 = sbr.rel (%p203) target = $region36
      $region35: #{tpu_custom_call.1} parent=5 // pred_region
        %s207 = ssub.s32 %s17, 1
        %s208 = sand.u32 %s30, 1
        %s209 = scalar_lea.sflag [#allocation5], %s208
        %s210 = sand.u32 %s30, 1
        %s211 = smul.addr %s210, 16
        %s212 = scalar_lea.vmem [#allocation4], %s211
        // Predicated region
        $region37: #{tpu_custom_call.1} parent=35 // pred_check
          %p213 = pneg %p43
        $region38: #{tpu_custom_call.1} parent=35 // pred_check_branch
          %215 = sbr.rel (%p213) target = $region40
        $region39: #{tpu_custom_call.1} parent=35 // pred_region
          %216 = dma.done %s209, 256
        $region40: #{tpu_custom_call.1} parent=35 // pred_fallthru
          _
        // Predicated region
        $region41: #{tpu_custom_call.1} parent=35 // pred_check
          %p217 = pneg %p64
        $region42: #{tpu_custom_call.1} parent=35 // pred_check_branch
          %219 = sbr.rel (%p217) target = $region44
        $region43: #{tpu_custom_call.1} parent=35 // pred_region
          %220 = dma.done [#allocation8], 3072
        $region44: #{tpu_custom_call.1} parent=35 // pred_fallthru
          _
        // Predicated region
        $region45: #{tpu_custom_call.1} parent=35 // pred_check
          %p221 = pneg %p85
        $region46: #{tpu_custom_call.1} parent=35 // pred_check_branch
          %223 = sbr.rel (%p221) target = $region48
        $region47: #{tpu_custom_call.1} parent=35 // pred_region
          %224 = dma.done [#allocation8], 6144
        $region48: #{tpu_custom_call.1} parent=35 // pred_fallthru
          _
        %s225 = sand.u32 %s30, 1
        %s226 = scalar_lea.sflag [#allocation5], %s225
        %s227 = sand.u32 %s30, 1
        %s228 = smul.addr %s227, 16
        %s229 = scalar_lea.vmem [#allocation4], %s228
        %p230 = pneg %p43
        %p231 = pneg %p40
        %p232 = pneg %p64
        %p233 = pneg %p61
        %p234 = pneg %p85
        %p235 = pneg %p82
        %p236 = pneg %p106
        %p237 = pneg %p103
        %p238 = pneg %p132
        %p239 = pneg %p129
        %s240 = sand.u32 %s119, 1
        %s241 = scalar_lea.sflag [#allocation6], %s240
        %s242 = sand.u32 %s119, 1
        %s243 = smul.addr %s242, 16
        %s244 = scalar_lea.vmem [#allocation10], %s243
        %vm245 = vcmask 516096
        %246 = vst.msk [vmem:[#allocation2] sm:$0x1] %vm245, 0.0
        %247 = vst.msk [vmem:[#allocation2 + $0x11] sm:$0x1] %vm245, 0.0
        %v248 = vld [vmem:[%s212] sm:$0xff]
        %v249 = vld [vmem:[%s212 + $0x8] sm:$0xff]
        %vm250 = vcmask 523264
        %251 = vst.msk [vmem:[#allocation2 + $0x1] sm:$0xff] %vm250, %v248
        %252 = vst.msk [vmem:[#allocation2 + $0x9] sm:$0xff] %vm250, %v249
        %v253 = vld [vmem:[#allocation2] sm:$0xff]
        %v254 = vld [vmem:[#allocation2 + $0x8] sm:$0xff]
        %v255 = vld [vmem:[#allocation7] sm:$0xff]
        %v256 = vld [vmem:[#allocation7 + $0x8] sm:$0xff]
        %v257 = vld [vmem:[#allocation7 + $0x10] sm:$0xff]
        %v258 = vld [vmem:[#allocation7 + $0x18] sm:$0xff]
        %v259 = vld [vmem:[#allocation7 + $0x20] sm:$0xff]
        %v260 = vld [vmem:[#allocation7 + $0x28] sm:$0xff]
        %v261 = vld [vmem:[#allocation7 + $0x30] sm:$0xff]
        %v262 = vld [vmem:[#allocation7 + $0x38] sm:$0xff]
        %v263 = vld [vmem:[#allocation2 + $0x1] sm:$0xff]
        %v264 = vld [vmem:[#allocation2 + $0x9] sm:$0xff]
        %s265 = scalar_lea.vmem [#allocation7], 64
        %v266 = vld [vmem:[%s265] sm:$0xff]
        %v267 = vld [vmem:[%s265 + $0x8] sm:$0xff]
        %v268 = vld [vmem:[%s265 + $0x10] sm:$0xff]
        %v269 = vld [vmem:[%s265 + $0x18] sm:$0xff]
        %v270 = vld [vmem:[%s265 + $0x20] sm:$0xff]
        %v271 = vld [vmem:[%s265 + $0x28] sm:$0xff]
        %v272 = vld [vmem:[%s265 + $0x30] sm:$0xff]
        %v273 = vld [vmem:[%s265 + $0x38] sm:$0xff]
        %v275 = vsel %vm250, %v263, 0
        %v278 = vsel %vm250, %v264, 0
        %280 = vmatprep.subr.mxu0 0.0
        %281 = vmatpush1.msra.mxu0 %v266
        %282 = vmatprep.subr.mxu0 0.0
        %283 = vmatpush1.msra.mxu0 %v267
        %284 = vmatprep.subr.mxu0 0.0
        %285 = vmatpush1.msra.mxu0 %v268
        %286 = vmatprep.subr.mxu0 0.0
        %287 = vmatpush1.msra.mxu0 %v269
        %288 = vmatprep.subr.mxu0 0.0
        %289 = vmatpush1.msra.mxu0 %v270
        %290 = vmatprep.subr.mxu0 0.0
        %291 = vmatpush1.msra.mxu0 %v271
        %292 = vmatprep.subr.mxu0 0.0
        %293 = vmatpush1.msra.mxu0 %v272
        %294 = vmatprep.subr.mxu0 0.0
        %295 = vmatpush1.msra.mxu0 %v273
        %296 = vmatprep.subr.mxu0 0.0
        %297 = vmatpush1.msra.mxu0 0.0
        %298 = vmatprep.subr.mxu0 0.0
        %299 = vmatpush1.msra.mxu0 0.0
        %300 = vmatprep.subr.mxu0 0.0
        %301 = vmatpush1.msra.mxu0 0.0
        %302 = vmatprep.subr.mxu0 0.0
        %303 = vmatpush1.msra.mxu0 0.0
        %304 = vmatprep.subr.mxu0 0.0
        %305 = vmatpush1.msra.mxu0 0.0
        %306 = vmatprep.subr.mxu0 0.0
        %307 = vmatpush1.msra.mxu0 0.0
        %308 = vmatprep.subr.mxu0 0.0
        %309 = vmatpush1.msra.mxu0 0.0
        %310 = vmatprep.subr.mxu0 0.0
        %311 = vmatpush1.msra.mxu0 0.0
        %312 = vmatprep.subr.mxu0 0.0
        %313 = vmatpush1.msra.mxu0 0.0
        %314 = vmatprep.subr.mxu0 0.0
        %315 = vmatpush1.msra.mxu0 0.0
        %316 = vmatprep.subr.mxu0 0.0
        %317 = vmatpush1.msra.mxu0 0.0
        %318 = vmatprep.subr.mxu0 0.0
        %319 = vmatpush1.msra.mxu0 0.0
        %320 = vmatprep.subr.mxu0 0.0
        %321 = vmatpush1.msra.mxu0 0.0
        %322 = vmatprep.subr.mxu0 0.0
        %323 = vmatpush1.msra.mxu0 0.0
        %324 = vmatprep.subr.mxu0 0.0
        %325 = vmatpush1.msra.mxu0 0.0
        %326 = vmatprep.subr.mxu0 0.0
        %327 = vmatpush1.msra.mxu0 0.0
        %328 = vmatprep.subr.mxu0 0.0
        %329 = vmatpush1.msra.mxu0 0.0
        %330 = vmatprep.subr.mxu0 0.0
        %331 = vmatpush1.msra.mxu0 0.0
        %332 = vmatprep.subr.mxu0 0.0
        %333 = vmatpush1.msra.mxu0 0.0
        %334 = vmatprep.subr.mxu0 0.0
        %335 = vmatpush1.msra.mxu0 0.0
        %336 = vmatprep.subr.mxu0 0.0
        %337 = vmatpush1.msra.mxu0 0.0
        %338 = vmatprep.subr.mxu0 0.0
        %339 = vmatpush1.msra.mxu0 0.0
        %340 = vmatprep.subr.mxu0 0.0
        %341 = vmatpush1.msra.mxu0 0.0
        %342 = vmatprep.subr.mxu0 0.0
        %343 = vmatpush1.msra.mxu0 0.0
        %344 = vmatprep.mubr.f32.mxu0 0.0
        %345 = vmatmul.mubr.f32.gmra.mrb[0].mxu0 %v275
        %v346 = vpop.f32.mrb[0].mxu0
        %v347 = vadd.f32 0.0, %v346
        %v348 = vpop.f32.mrb[0].mxu0
        %349 = vmatprep.mubr.f32.mxu0 0.0
        %350 = vmatmul.mubr.f32.gmra.mrb[0].mxu0 %v278
        %v351 = vpop.f32.mrb[0].mxu0
        %v352 = vadd.f32 0.0, %v351
        %v353 = vpop.f32.mrb[0].mxu0
        %354 = vdwg.mxu0
        %v356 = vsel %vm250, %v253, 0
        %v359 = vsel %vm250, %v254, 0
        %361 = vmatprep.subr.mxu0 0.0
        %362 = vmatpush1.msra.mxu0 %v255
        %363 = vmatprep.subr.mxu0 0.0
        %364 = vmatpush1.msra.mxu0 %v256
        %365 = vmatprep.subr.mxu0 0.0
        %366 = vmatpush1.msra.mxu0 %v257
        %367 = vmatprep.subr.mxu0 0.0
        %368 = vmatpush1.msra.mxu0 %v258
        %369 = vmatprep.subr.mxu0 0.0
        %370 = vmatpush1.msra.mxu0 %v259
        %371 = vmatprep.subr.mxu0 0.0
        %372 = vmatpush1.msra.mxu0 %v260
        %373 = vmatprep.subr.mxu0 0.0
        %374 = vmatpush1.msra.mxu0 %v261
        %375 = vmatprep.subr.mxu0 0.0
        %376 = vmatpush1.msra.mxu0 %v262
        %377 = vmatprep.subr.mxu0 0.0
        %378 = vmatpush1.msra.mxu0 0.0
        %379 = vmatprep.subr.mxu0 0.0
        %380 = vmatpush1.msra.mxu0 0.0
        %381 = vmatprep.subr.mxu0 0.0
        %382 = vmatpush1.msra.mxu0 0.0
        %383 = vmatprep.subr.mxu0 0.0
        %384 = vmatpush1.msra.mxu0 0.0
        %385 = vmatprep.subr.mxu0 0.0
        %386 = vmatpush1.msra.mxu0 0.0
        %387 = vmatprep.subr.mxu0 0.0
        %388 = vmatpush1.msra.mxu0 0.0
        %389 = vmatprep.subr.mxu0 0.0
        %390 = vmatpush1.msra.mxu0 0.0
        %391 = vmatprep.subr.mxu0 0.0
        %392 = vmatpush1.msra.mxu0 0.0
        %393 = vmatprep.subr.mxu0 0.0
        %394 = vmatpush1.msra.mxu0 0.0
        %395 = vmatprep.subr.mxu0 0.0
        %396 = vmatpush1.msra.mxu0 0.0
        %397 = vmatprep.subr.mxu0 0.0
        %398 = vmatpush1.msra.mxu0 0.0
        %399 = vmatprep.subr.mxu0 0.0
        %400 = vmatpush1.msra.mxu0 0.0
        %401 = vmatprep.subr.mxu0 0.0
        %402 = vmatpush1.msra.mxu0 0.0
        %403 = vmatprep.subr.mxu0 0.0
        %404 = vmatpush1.msra.mxu0 0.0
        %405 = vmatprep.subr.mxu0 0.0
        %406 = vmatpush1.msra.mxu0 0.0
        %407 = vmatprep.subr.mxu0 0.0
        %408 = vmatpush1.msra.mxu0 0.0
        %409 = vmatprep.subr.mxu0 0.0
        %410 = vmatpush1.msra.mxu0 0.0
        %411 = vmatprep.subr.mxu0 0.0
        %412 = vmatpush1.msra.mxu0 0.0
        %413 = vmatprep.subr.mxu0 0.0
        %414 = vmatpush1.msra.mxu0 0.0
        %415 = vmatprep.subr.mxu0 0.0
        %416 = vmatpush1.msra.mxu0 0.0
        %417 = vmatprep.subr.mxu0 0.0
        %418 = vmatpush1.msra.mxu0 0.0
        %419 = vmatprep.subr.mxu0 0.0
        %420 = vmatpush1.msra.mxu0 0.0
        %421 = vmatprep.subr.mxu0 0.0
        %422 = vmatpush1.msra.mxu0 0.0
        %423 = vmatprep.subr.mxu0 0.0
        %424 = vmatpush1.msra.mxu0 0.0
        %425 = vmatprep.mubr.f32.mxu0 0.0
        %426 = vmatmul.mubr.f32.gmra.mrb[0].mxu0 %v356
        %v427 = vpop.f32.mrb[0].mxu0
        %v428 = vadd.f32 %v347, %v427
        %v429 = vpop.f32.mrb[0].mxu0
        %430 = vmatprep.mubr.f32.mxu0 0.0
        %431 = vmatmul.mubr.f32.gmra.mrb[0].mxu0 %v359
        %v432 = vpop.f32.mrb[0].mxu0
        %v433 = vadd.f32 %v352, %v432
        %v434 = vpop.f32.mrb[0].mxu0
        %435 = vdwg.mxu0
        %v436 = vld [vmem:[#allocation2 + $0x2] sm:$0xff]
        %v437 = vld [vmem:[#allocation2 + $0xa] sm:$0xff]
        %s438 = scalar_lea.vmem [#allocation7], 128
        %v439 = vld [vmem:[%s438] sm:$0xff]
        %v440 = vld [vmem:[%s438 + $0x8] sm:$0xff]
        %v441 = vld [vmem:[%s438 + $0x10] sm:$0xff]
        %v442 = vld [vmem:[%s438 + $0x18] sm:$0xff]
        %v443 = vld [vmem:[%s438 + $0x20] sm:$0xff]
        %v444 = vld [vmem:[%s438 + $0x28] sm:$0xff]
        %v445 = vld [vmem:[%s438 + $0x30] sm:$0xff]
        %v446 = vld [vmem:[%s438 + $0x38] sm:$0xff]
        %v448 = vsel %vm250, %v436, 0
        %v451 = vsel %vm250, %v437, 0
        %453 = vmatprep.subr.mxu0 0.0
        %454 = vmatpush1.msra.mxu0 %v439
        %455 = vmatprep.subr.mxu0 0.0
        %456 = vmatpush1.msra.mxu0 %v440
        %457 = vmatprep.subr.mxu0 0.0
        %458 = vmatpush1.msra.mxu0 %v441
        %459 = vmatprep.subr.mxu0 0.0
        %460 = vmatpush1.msra.mxu0 %v442
        %461 = vmatprep.subr.mxu0 0.0
        %462 = vmatpush1.msra.mxu0 %v443
        %463 = vmatprep.subr.mxu0 0.0
        %464 = vmatpush1.msra.mxu0 %v444
        %465 = vmatprep.subr.mxu0 0.0
        %466 = vmatpush1.msra.mxu0 %v445
        %467 = vmatprep.subr.mxu0 0.0
        %468 = vmatpush1.msra.mxu0 %v446
        %469 = vmatprep.subr.mxu0 0.0
        %470 = vmatpush1.msra.mxu0 0.0
        %471 = vmatprep.subr.mxu0 0.0
        %472 = vmatpush1.msra.mxu0 0.0
        %473 = vmatprep.subr.mxu0 0.0
        %474 = vmatpush1.msra.mxu0 0.0
        %475 = vmatprep.subr.mxu0 0.0
        %476 = vmatpush1.msra.mxu0 0.0
        %477 = vmatprep.subr.mxu0 0.0
        %478 = vmatpush1.msra.mxu0 0.0
        %479 = vmatprep.subr.mxu0 0.0
        %480 = vmatpush1.msra.mxu0 0.0
        %481 = vmatprep.subr.mxu0 0.0
        %482 = vmatpush1.msra.mxu0 0.0
        %483 = vmatprep.subr.mxu0 0.0
        %484 = vmatpush1.msra.mxu0 0.0
        %485 = vmatprep.subr.mxu0 0.0
        %486 = vmatpush1.msra.mxu0 0.0
        %487 = vmatprep.subr.mxu0 0.0
        %488 = vmatpush1.msra.mxu0 0.0
        %489 = vmatprep.subr.mxu0 0.0
        %490 = vmatpush1.msra.mxu0 0.0
        %491 = vmatprep.subr.mxu0 0.0
        %492 = vmatpush1.msra.mxu0 0.0
        %493 = vmatprep.subr.mxu0 0.0
        %494 = vmatpush1.msra.mxu0 0.0
        %495 = vmatprep.subr.mxu0 0.0
        %496 = vmatpush1.msra.mxu0 0.0
        %497 = vmatprep.subr.mxu0 0.0
        %498 = vmatpush1.msra.mxu0 0.0
        %499 = vmatprep.subr.mxu0 0.0
        %500 = vmatpush1.msra.mxu0 0.0
        %501 = vmatprep.subr.mxu0 0.0
        %502 = vmatpush1.msra.mxu0 0.0
        %503 = vmatprep.subr.mxu0 0.0
        %504 = vmatpush1.msra.mxu0 0.0
        %505 = vmatprep.subr.mxu0 0.0
        %506 = vmatpush1.msra.mxu0 0.0
        %507 = vmatprep.subr.mxu0 0.0
        %508 = vmatpush1.msra.mxu0 0.0
        %509 = vmatprep.subr.mxu0 0.0
        %510 = vmatpush1.msra.mxu0 0.0
        %511 = vmatprep.subr.mxu0 0.0
        %512 = vmatpush1.msra.mxu0 0.0
        %513 = vmatprep.subr.mxu0 0.0
        %514 = vmatpush1.msra.mxu0 0.0
        %515 = vmatprep.subr.mxu0 0.0
        %516 = vmatpush1.msra.mxu0 0.0
        %517 = vmatprep.mubr.f32.mxu0 0.0
        %518 = vmatmul.mubr.f32.gmra.mrb[0].mxu0 %v448
        %v519 = vpop.f32.mrb[0].mxu0
        %v520 = vadd.f32 0.0, %v519
        %v521 = vpop.f32.mrb[0].mxu0
        %522 = vmatprep.mubr.f32.mxu0 0.0
        %523 = vmatmul.mubr.f32.gmra.mrb[0].mxu0 %v451
        %v524 = vpop.f32.mrb[0].mxu0
        %v525 = vadd.f32 0.0, %v524
        %v526 = vpop.f32.mrb[0].mxu0
        %527 = vdwg.mxu0
        %v528 = vadd.f32 %v428, %v520
        %v529 = vadd.f32 %v433, %v525
        %v530 = vld [vmem:[%s3] sm:$0x1]
        %v531 = vlaneseq
        %v532 = vshrl.u32 %v531, 7
        %v533 = vsub.s32 0, %v532
        %v534 = vrot.slane %v530, %v533
        %v535 = vadd.f32 %v528, %v534
        %v536 = vadd.f32 %v529, %v534
        %v537 = vmax.f32 %v535, 0.0
        %v538 = vmax.f32 %v536, 0.0
        %539 = vst [vmem:[#allocation3] sm:$0x1] 0.0
        %540 = vst [vmem:[#allocation3 + $0x11] sm:$0x1] 0.0
        %541 = vst [vmem:[#allocation3 + $0x1] sm:$0xff] %v537
        %542 = vst [vmem:[#allocation3 + $0x9] sm:$0xff] %v538
        %v543 = vld [vmem:[#allocation3] sm:$0xff]
        %v544 = vld [vmem:[#allocation3 + $0x8] sm:$0xff]
        %v545 = vld [vmem:[#allocation9] sm:$0xff]
        %v546 = vld [vmem:[#allocation9 + $0x8] sm:$0xff]
        %v547 = vld [vmem:[#allocation9 + $0x10] sm:$0xff]
        %v548 = vld [vmem:[#allocation9 + $0x18] sm:$0xff]
        %v549 = vld [vmem:[#allocation9 + $0x20] sm:$0xff]
        %v550 = vld [vmem:[#allocation9 + $0x28] sm:$0xff]
        %v551 = vld [vmem:[#allocation9 + $0x30] sm:$0xff]
        %v552 = vld [vmem:[#allocation9 + $0x38] sm:$0xff]
        %v553 = vld [vmem:[#allocation9 + $0x40] sm:$0xff]
        %v554 = vld [vmem:[#allocation9 + $0x48] sm:$0xff]
        %v555 = vld [vmem:[#allocation9 + $0x50] sm:$0xff]
        %v556 = vld [vmem:[#allocation9 + $0x58] sm:$0xff]
        %v557 = vld [vmem:[#allocation9 + $0x60] sm:$0xff]
        %v558 = vld [vmem:[#allocation9 + $0x68] sm:$0xff]
        %v559 = vld [vmem:[#allocation9 + $0x70] sm:$0xff]
        %v560 = vld [vmem:[#allocation9 + $0x78] sm:$0xff]
        %v561 = vld [vmem:[#allocation3 + $0x1] sm:$0xff]
        %v562 = vld [vmem:[#allocation3 + $0x9] sm:$0xff]
        %s563 = scalar_lea.vmem [#allocation9], 128
        %v564 = vld [vmem:[%s563] sm:$0xff]
        %v565 = vld [vmem:[%s563 + $0x8] sm:$0xff]
        %v566 = vld [vmem:[%s563 + $0x10] sm:$0xff]
        %v567 = vld [vmem:[%s563 + $0x18] sm:$0xff]
        %v568 = vld [vmem:[%s563 + $0x20] sm:$0xff]
        %v569 = vld [vmem:[%s563 + $0x28] sm:$0xff]
        %v570 = vld [vmem:[%s563 + $0x30] sm:$0xff]
        %v571 = vld [vmem:[%s563 + $0x38] sm:$0xff]
        %v572 = vld [vmem:[%s563 + $0x40] sm:$0xff]
        %v573 = vld [vmem:[%s563 + $0x48] sm:$0xff]
        %v574 = vld [vmem:[%s563 + $0x50] sm:$0xff]
        %v575 = vld [vmem:[%s563 + $0x58] sm:$0xff]
        %v576 = vld [vmem:[%s563 + $0x60] sm:$0xff]
        %v577 = vld [vmem:[%s563 + $0x68] sm:$0xff]
        %v578 = vld [vmem:[%s563 + $0x70] sm:$0xff]
        %v579 = vld [vmem:[%s563 + $0x78] sm:$0xff]
        %580 = vmatprep.subr.mxu0 0.0
        %581 = vmatpush1.msra.mxu0 %v564
        %582 = vmatprep.subr.mxu0 0.0
        %583 = vmatpush1.msra.mxu0 %v565
        %584 = vmatprep.subr.mxu0 0.0
        %585 = vmatpush1.msra.mxu0 %v566
        %586 = vmatprep.subr.mxu0 0.0
        %587 = vmatpush1.msra.mxu0 %v567
        %588 = vmatprep.subr.mxu0 0.0
        %589 = vmatpush1.msra.mxu0 %v568
        %590 = vmatprep.subr.mxu0 0.0
        %591 = vmatpush1.msra.mxu0 %v569
        %592 = vmatprep.subr.mxu0 0.0
        %593 = vmatpush1.msra.mxu0 %v570
        %594 = vmatprep.subr.mxu0 0.0
        %595 = vmatpush1.msra.mxu0 %v571
        %596 = vmatprep.subr.mxu0 0.0
        %597 = vmatpush1.msra.mxu0 %v572
        %598 = vmatprep.subr.mxu0 0.0
        %599 = vmatpush1.msra.mxu0 %v573
        %600 = vmatprep.subr.mxu0 0.0
        %601 = vmatpush1.msra.mxu0 %v574
        %602 = vmatprep.subr.mxu0 0.0
        %603 = vmatpush1.msra.mxu0 %v575
        %604 = vmatprep.subr.mxu0 0.0
        %605 = vmatpush1.msra.mxu0 %v576
        %606 = vmatprep.subr.mxu0 0.0
        %607 = vmatpush1.msra.mxu0 %v577
        %608 = vmatprep.subr.mxu0 0.0
        %609 = vmatpush1.msra.mxu0 %v578
        %610 = vmatprep.subr.mxu0 0.0
        %611 = vmatpush1.msra.mxu0 %v579
        %612 = vmatprep.subr.mxu0 0.0
        %613 = vmatpush1.msra.mxu0 0.0
        %614 = vmatprep.subr.mxu0 0.0
        %615 = vmatpush1.msra.mxu0 0.0
        %616 = vmatprep.subr.mxu0 0.0
        %617 = vmatpush1.msra.mxu0 0.0
        %618 = vmatprep.subr.mxu0 0.0
        %619 = vmatpush1.msra.mxu0 0.0
        %620 = vmatprep.subr.mxu0 0.0
        %621 = vmatpush1.msra.mxu0 0.0
        %622 = vmatprep.subr.mxu0 0.0
        %623 = vmatpush1.msra.mxu0 0.0
        %624 = vmatprep.subr.mxu0 0.0
        %625 = vmatpush1.msra.mxu0 0.0
        %626 = vmatprep.subr.mxu0 0.0
        %627 = vmatpush1.msra.mxu0 0.0
        %628 = vmatprep.subr.mxu0 0.0
        %629 = vmatpush1.msra.mxu0 0.0
        %630 = vmatprep.subr.mxu0 0.0
        %631 = vmatpush1.msra.mxu0 0.0
        %632 = vmatprep.subr.mxu0 0.0
        %633 = vmatpush1.msra.mxu0 0.0
        %634 = vmatprep.subr.mxu0 0.0
        %635 = vmatpush1.msra.mxu0 0.0
        %636 = vmatprep.subr.mxu0 0.0
        %637 = vmatpush1.msra.mxu0 0.0
        %638 = vmatprep.subr.mxu0 0.0
        %639 = vmatpush1.msra.mxu0 0.0
        %640 = vmatprep.subr.mxu0 0.0
        %641 = vmatpush1.msra.mxu0 0.0
        %642 = vmatprep.subr.mxu0 0.0
        %643 = vmatpush1.msra.mxu0 0.0
        %644 = vmatprep.mubr.f32.mxu0 0.0
        %645 = vmatmul.mubr.f32.gmra.mrb[0].mxu0 %v561
        %v646 = vpop.f32.mrb[0].mxu0
        %v647 = vadd.f32 0.0, %v646
        %v648 = vpop.f32.mrb[0].mxu0
        %649 = vmatprep.mubr.f32.mxu0 0.0
        %650 = vmatmul.mubr.f32.gmra.mrb[0].mxu0 %v562
        %v651 = vpop.f32.mrb[0].mxu0
        %v652 = vadd.f32 0.0, %v651
        %v653 = vpop.f32.mrb[0].mxu0
        %654 = vdwg.mxu0
        %655 = vmatprep.subr.mxu0 0.0
        %656 = vmatpush1.msra.mxu0 %v545
        %657 = vmatprep.subr.mxu0 0.0
        %658 = vmatpush1.msra.mxu0 %v546
        %659 = vmatprep.subr.mxu0 0.0
        %660 = vmatpush1.msra.mxu0 %v547
        %661 = vmatprep.subr.mxu0 0.0
        %662 = vmatpush1.msra.mxu0 %v548
        %663 = vmatprep.subr.mxu0 0.0
        %664 = vmatpush1.msra.mxu0 %v549
        %665 = vmatprep.subr.mxu0 0.0
        %666 = vmatpush1.msra.mxu0 %v550
        %667 = vmatprep.subr.mxu0 0.0
        %668 = vmatpush1.msra.mxu0 %v551
        %669 = vmatprep.subr.mxu0 0.0
        %670 = vmatpush1.msra.mxu0 %v552
        %671 = vmatprep.subr.mxu0 0.0
        %672 = vmatpush1.msra.mxu0 %v553
        %673 = vmatprep.subr.mxu0 0.0
        %674 = vmatpush1.msra.mxu0 %v554
        %675 = vmatprep.subr.mxu0 0.0
        %676 = vmatpush1.msra.mxu0 %v555
        %677 = vmatprep.subr.mxu0 0.0
        %678 = vmatpush1.msra.mxu0 %v556
        %679 = vmatprep.subr.mxu0 0.0
        %680 = vmatpush1.msra.mxu0 %v557
        %681 = vmatprep.subr.mxu0 0.0
        %682 = vmatpush1.msra.mxu0 %v558
        %683 = vmatprep.subr.mxu0 0.0
        %684 = vmatpush1.msra.mxu0 %v559
        %685 = vmatprep.subr.mxu0 0.0
        %686 = vmatpush1.msra.mxu0 %v560
        %687 = vmatprep.subr.mxu0 0.0
        %688 = vmatpush1.msra.mxu0 0.0
        %689 = vmatprep.subr.mxu0 0.0
        %690 = vmatpush1.msra.mxu0 0.0
        %691 = vmatprep.subr.mxu0 0.0
        %692 = vmatpush1.msra.mxu0 0.0
        %693 = vmatprep.subr.mxu0 0.0
        %694 = vmatpush1.msra.mxu0 0.0
        %695 = vmatprep.subr.mxu0 0.0
        %696 = vmatpush1.msra.mxu0 0.0
        %697 = vmatprep.subr.mxu0 0.0
        %698 = vmatpush1.msra.mxu0 0.0
        %699 = vmatprep.subr.mxu0 0.0
        %700 = vmatpush1.msra.mxu0 0.0
        %701 = vmatprep.subr.mxu0 0.0
        %702 = vmatpush1.msra.mxu0 0.0
        %703 = vmatprep.subr.mxu0 0.0
        %704 = vmatpush1.msra.mxu0 0.0
        %705 = vmatprep.subr.mxu0 0.0
        %706 = vmatpush1.msra.mxu0 0.0
        %707 = vmatprep.subr.mxu0 0.0
        %708 = vmatpush1.msra.mxu0 0.0
        %709 = vmatprep.subr.mxu0 0.0
        %710 = vmatpush1.msra.mxu0 0.0
        %711 = vmatprep.subr.mxu0 0.0
        %712 = vmatpush1.msra.mxu0 0.0
        %713 = vmatprep.subr.mxu0 0.0
        %714 = vmatpush1.msra.mxu0 0.0
        %715 = vmatprep.subr.mxu0 0.0
        %716 = vmatpush1.msra.mxu0 0.0
        %717 = vmatprep.subr.mxu0 0.0
        %718 = vmatpush1.msra.mxu0 0.0
        %719 = vmatprep.mubr.f32.mxu0 0.0
        %720 = vmatmul.mubr.f32.gmra.mrb[0].mxu0 %v543
        %v721 = vpop.f32.mrb[0].mxu0
        %v722 = vadd.f32 %v647, %v721
        %v723 = vpop.f32.mrb[0].mxu0
        %724 = vmatprep.mubr.f32.mxu0 0.0
        %725 = vmatmul.mubr.f32.gmra.mrb[0].mxu0 %v544
        %v726 = vpop.f32.mrb[0].mxu0
        %v727 = vadd.f32 %v652, %v726
        %v728 = vpop.f32.mrb[0].mxu0
        %729 = vdwg.mxu0
        %v730 = vld [vmem:[#allocation3 + $0x2] sm:$0xff]
        %v731 = vld [vmem:[#allocation3 + $0xa] sm:$0xff]
        %s732 = scalar_lea.vmem [#allocation9], 256
        %v733 = vld [vmem:[%s732] sm:$0xff]
        %v734 = vld [vmem:[%s732 + $0x8] sm:$0xff]
        %v735 = vld [vmem:[%s732 + $0x10] sm:$0xff]
        %v736 = vld [vmem:[%s732 + $0x18] sm:$0xff]
        %v737 = vld [vmem:[%s732 + $0x20] sm:$0xff]
        %v738 = vld [vmem:[%s732 + $0x28] sm:$0xff]
        %v739 = vld [vmem:[%s732 + $0x30] sm:$0xff]
        %v740 = vld [vmem:[%s732 + $0x38] sm:$0xff]
        %v741 = vld [vmem:[%s732 + $0x40] sm:$0xff]
        %v742 = vld [vmem:[%s732 + $0x48] sm:$0xff]
        %v743 = vld [vmem:[%s732 + $0x50] sm:$0xff]
        %v744 = vld [vmem:[%s732 + $0x58] sm:$0xff]
        %v745 = vld [vmem:[%s732 + $0x60] sm:$0xff]
        %v746 = vld [vmem:[%s732 + $0x68] sm:$0xff]
        %v747 = vld [vmem:[%s732 + $0x70] sm:$0xff]
        %v748 = vld [vmem:[%s732 + $0x78] sm:$0xff]
        %749 = vmatprep.subr.mxu0 0.0
        %750 = vmatpush1.msra.mxu0 %v733
        %751 = vmatprep.subr.mxu0 0.0
        %752 = vmatpush1.msra.mxu0 %v734
        %753 = vmatprep.subr.mxu0 0.0
        %754 = vmatpush1.msra.mxu0 %v735
        %755 = vmatprep.subr.mxu0 0.0
        %756 = vmatpush1.msra.mxu0 %v736
        %757 = vmatprep.subr.mxu0 0.0
        %758 = vmatpush1.msra.mxu0 %v737
        %759 = vmatprep.subr.mxu0 0.0
        %760 = vmatpush1.msra.mxu0 %v738
        %761 = vmatprep.subr.mxu0 0.0
        %762 = vmatpush1.msra.mxu0 %v739
        %763 = vmatprep.subr.mxu0 0.0
        %764 = vmatpush1.msra.mxu0 %v740
        %765 = vmatprep.subr.mxu0 0.0
        %766 = vmatpush1.msra.mxu0 %v741
        %767 = vmatprep.subr.mxu0 0.0
        %768 = vmatpush1.msra.mxu0 %v742
        %769 = vmatprep.subr.mxu0 0.0
        %770 = vmatpush1.msra.mxu0 %v743
        %771 = vmatprep.subr.mxu0 0.0
        %772 = vmatpush1.msra.mxu0 %v744
        %773 = vmatprep.subr.mxu0 0.0
        %774 = vmatpush1.msra.mxu0 %v745
        %775 = vmatprep.subr.mxu0 0.0
        %776 = vmatpush1.msra.mxu0 %v746
        %777 = vmatprep.subr.mxu0 0.0
        %778 = vmatpush1.msra.mxu0 %v747
        %779 = vmatprep.subr.mxu0 0.0
        %780 = vmatpush1.msra.mxu0 %v748
        %781 = vmatprep.subr.mxu0 0.0
        %782 = vmatpush1.msra.mxu0 0.0
        %783 = vmatprep.subr.mxu0 0.0
        %784 = vmatpush1.msra.mxu0 0.0
        %785 = vmatprep.subr.mxu0 0.0
        %786 = vmatpush1.msra.mxu0 0.0
        %787 = vmatprep.subr.mxu0 0.0
        %788 = vmatpush1.msra.mxu0 0.0
        %789 = vmatprep.subr.mxu0 0.0
        %790 = vmatpush1.msra.mxu0 0.0
        %791 = vmatprep.subr.mxu0 0.0
        %792 = vmatpush1.msra.mxu0 0.0
        %793 = vmatprep.subr.mxu0 0.0
        %794 = vmatpush1.msra.mxu0 0.0
        %795 = vmatprep.subr.mxu0 0.0
        %796 = vmatpush1.msra.mxu0 0.0
        %797 = vmatprep.subr.mxu0 0.0
        %798 = vmatpush1.msra.mxu0 0.0
        %799 = vmatprep.subr.mxu0 0.0
        %800 = vmatpush1.msra.mxu0 0.0
        %801 = vmatprep.subr.mxu0 0.0
        %802 = vmatpush1.msra.mxu0 0.0
        %803 = vmatprep.subr.mxu0 0.0
        %804 = vmatpush1.msra.mxu0 0.0
        %805 = vmatprep.subr.mxu0 0.0
        %806 = vmatpush1.msra.mxu0 0.0
        %807 = vmatprep.subr.mxu0 0.0
        %808 = vmatpush1.msra.mxu0 0.0
        %809 = vmatprep.subr.mxu0 0.0
        %810 = vmatpush1.msra.mxu0 0.0
        %811 = vmatprep.subr.mxu0 0.0
        %812 = vmatpush1.msra.mxu0 0.0
        %813 = vmatprep.mubr.f32.mxu0 0.0
        %814 = vmatmul.mubr.f32.gmra.mrb[0].mxu0 %v730
        %v815 = vpop.f32.mrb[0].mxu0
        %v816 = vadd.f32 0.0, %v815
        %v817 = vpop.f32.mrb[0].mxu0
        %818 = vmatprep.mubr.f32.mxu0 0.0
        %819 = vmatmul.mubr.f32.gmra.mrb[0].mxu0 %v731
        %v820 = vpop.f32.mrb[0].mxu0
        %v821 = vadd.f32 0.0, %v820
        %v822 = vpop.f32.mrb[0].mxu0
        %823 = vdwg.mxu0
        %v824 = vadd.f32 %v722, %v816
        %v825 = vadd.f32 %v727, %v821
        %v826 = vld [vmem:[%s3 + $0x1] sm:$0x1]
        %v827 = vlaneseq
        %v828 = vshrl.u32 %v827, 7
        %v829 = vsub.s32 0, %v828
        %v830 = vrot.slane %v826, %v829
        %v831 = vadd.f32 %v824, %v830
        %v832 = vadd.f32 %v825, %v830
        %v833 = vmax.f32 %v831, 0.0
        %v834 = vmax.f32 %v832, 0.0
        %835 = vst [vmem:[%s244] sm:$0xff] %v833
        %836 = vst [vmem:[%s244 + $0x8] sm:$0xff] %v834
        %s837 = sand.u32 %s119, 1
        %s838 = scalar_lea.sflag [#allocation6], %s837
        %s839 = sand.u32 %s119, 1
        %s840 = smul.addr %s839, 16
        %s841 = scalar_lea.vmem [#allocation10], %s840
        // Predicated region
        $region49: #{tpu_custom_call.1} parent=35 // pred_check
          %p842 = pneg %p129
        $region50: #{tpu_custom_call.1} parent=35 // pred_check_branch
          %844 = sbr.rel (%p842) target = $region52
        $region51: #{tpu_custom_call.1} parent=35 // pred_region
          %s846 = ssub.s32 256, 256
          %847 = vsyncadd %s838, %s846
          %s848 = smul.addr %s22, 2
          %s849 = smul.addr %s848, 128
          %s850 = scalar_lea.hbm %s4, %s849
          %s851 = sshll.u32 %s841, 4
          %s852 = int_to_ptr.vmem [resolvable:$true] %s851
          %857 = dma.vmem_to_hbm [thread:$0]  %s852, 256, %s850, %s838, 128, 128, 8
        $region52: #{tpu_custom_call.1} parent=35 // pred_fallthru
          _
      $region36: #{tpu_custom_call.1} parent=5 // pred_fallthru
        _
      %p858 = scmp.le.s32.totalorder 2, %s17
      // Predicated region
      $region53: #{tpu_custom_call.1} parent=5 // pred_check
        %p859 = pneg %p858
      $region54: #{tpu_custom_call.1} parent=5 // pred_check_branch
        %861 = sbr.rel (%p859) target = $region56
      $region55: #{tpu_custom_call.1} parent=5 // pred_region
        %s862 = ssub.s32 %s17, 2
        // Predicated region
        $region57: #{tpu_custom_call.1} parent=55 // pred_check
          %p863 = pneg %p135
        $region58: #{tpu_custom_call.1} parent=55 // pred_check_branch
          %865 = sbr.rel (%p863) target = $region60
        $region59: #{tpu_custom_call.1} parent=55 // pred_region
          %s866 = sand.u32 %s120, 1
          %s867 = scalar_lea.sflag [#allocation6], %s866
          %s868 = sand.u32 %s120, 1
          %s869 = smul.addr %s868, 16
          %s870 = scalar_lea.vmem [#allocation10], %s869
          %871 = dma.done %s867, 256
        $region60: #{tpu_custom_call.1} parent=55 // pred_fallthru
          _
      $region56: #{tpu_custom_call.1} parent=5 // pred_fallthru
        _
    $region6: #{tpu_custom_call.1} parent=1 // loop_footer
      %s21 = sadd.s32 1, %s17
    $region7: #{tpu_custom_call.1} parent=1 // loop_footer_branch
      %16 = sbr.rel target = $region3
    $region8: #{tpu_custom_call.1} parent=1 // loop_exit
      _
    %872 = vsyncpa [#allocation5], 1
    %s873 = scalar_lea.sflag [#allocation5], 1
    %874 = vsyncpa %s873, 1
    %875 = vsyncpa [#allocation8], 1
    %876 = vsyncpa [#allocation6], 1
    %s877 = scalar_lea.sflag [#allocation6], 1
    %878 = vsyncpa %s877, 1

</llo_original>
